<compile_context>
chip_gen: v7x
topology: tpu7x:2x2x1
jax: 0.10.0
libtpu: 0.0.40
codegen_flags: <defaults>
</compile_context>

<pallas_src>
import math

import jax
import jax.numpy as jnp
from jax.experimental import pallas as pl
from jax.experimental.pallas import tpu as pltpu

LANES = 128


def _round_up(v, m):
    return ((v + m - 1) // m) * m


def _cdiv(a, b):
    return -(-a // b)


# ----------------------------------------------------------------------------- #
# Pallas kernel factory
# ----------------------------------------------------------------------------- #
def _make_diffusion_loss_kernel(valid_elems, row_tile, needs_mask):
    """Build the fused loss kernel for one static configuration.

    valid_elems: number of real (unpadded) elements per batch element
    row_tile:    packed 128-lane rows per grid step (multiple of 16 for bf16 tiles)
    needs_mask:  whether the last tile contains padded elements to be zeroed
    """
    groups = row_tile // 8

    def kernel(scal_ref, x_ref, n_ref, w_ref, bias_ref, out_ref):
        b = pl.program_id(0)      # batch element            ("parallel")
        t = pl.program_id(1)      # packed-row tile index    ("arbitrary" reduction)

        # Per-batch accumulator lives in the resident output block (index map
        # ignores t), zeroed at the start of every batch's tile loop.
        @pl.when(t == 0)
        def _():
            out_ref[...] = jnp.zeros(out_ref.shape, out_ref.dtype)

        sigma = scal_ref[b, 0]
        c_skip = scal_ref[b, 1]
        ci_co = scal_ref[b, 2]     # c_in * c_out folded (saves one full-tile vmul)
        c_out = scal_ref[b, 3]

        # bf16 in HBM -> f32 in vregs (halves HBM read bytes; f32 elementwise math).
        x = x_ref[0].astype(jnp.float32)           # (row_tile, 128)
        noise = n_ref[0].astype(jnp.float32)       # (row_tile, 128)

        noised = x + noise * sigma                 # add_noise (VPU)
        # synthetic network: block-diagonal channel linear -> native 128x128 MXU op
        # in bf16 (c_in folded into the output scale below).
        raw = jnp.dot(noised.astype(jnp.bfloat16), w_ref[...],
                      preferred_element_type=jnp.float32)
        d_out = raw * ci_co + bias_ref[...] * c_out + noised * c_skip
        diff = d_out - x
        sq = diff * diff

        def accumulate(vals):
            # Wide (8,128) accumulation: pure vreg adds, no cross-lane/sublane reduce.
            out_ref[0] += vals.reshape(groups, 8, LANES).sum(axis=0)

        if needs_mask:
            # Padding is always at the tail, so only the LAST tile needs the
            # iota/compare/select mask; all other tiles accumulate unmasked.
            last = pl.num_programs(1) - 1

            @pl.when(t != last)
            def _():
                accumulate(sq)

            @pl.when(t == last)
            def _():
                row = jax.lax.broadcasted_iota(jnp.int32, (row_tile, LANES), 0)
                lane = jax.lax.broadcasted_iota(jnp.int32, (row_tile, LANES), 1)
                elem = (t * row_tile + row) * LANES + lane
                accumulate(jnp.where(elem < valid_elems, sq, 0.0))
        else:
            accumulate(sq)

    return kernel


# ----------------------------------------------------------------------------- #
# Wrapper: lane packing + pallas_call
# ----------------------------------------------------------------------------- #
def diffusion_loss_partial_sums(x_tok, noise_tok, scalars, w_big, bias_big, *,
                                row_tile=4096):
    """Per-batch unweighted sums of squared denoiser error, as an (8,128) slab.

    x_tok:     [B, N, C]  clean latents in token (channels-last) layout
    noise_tok: [B, N, C]  gaussian noise (same layout)
    scalars:   [B, 4]     f32 (sigma, c_skip, c_in*c_out, c_out) per batch element
    w_big:     [128,128]  bf16 block-diagonal network weight  kron(I_{128//C}, W)
    bias_big:  [1,128]    f32 lane-tiled network bias
    Returns    [B, 8, 128] f32 partial sums (slab sum == per-batch sum of diff^2).
    """
    B, N, C = x_tok.shape
    if LANES % C != 0:
        raise ValueError(f"channel dim {C} must divide {LANES} for lane packing")

    elems = N * C                                   # valid elements per batch
    rows = _cdiv(elems, LANES)                      # packed 128-lane rows per batch
    rows16 = _round_up(rows, 16)                    # bf16 (16,128) sublane tiling
    row_tile = max(16, _round_up(row_tile, 16))

    # Choose n_tiles first, then the smallest 16-aligned rt that covers rows16,
    # so rows_pad = rt * n_tiles exceeds rows by < 16*n_tiles rows (tiny pad),
    # never by up to a whole row_tile.  No boundary (partial) blocks are used.
    n_tiles = _cdiv(rows16, row_tile)
    rt = _round_up(_cdiv(rows16, n_tiles), 16)
    rows_pad = rt * n_tiles
    elems_pad = rows_pad * LANES
    needs_mask = elems_pad != elems

    def pack(a):
        # Contiguous flatten; bf16 cast halves streamed bytes.  The pad (when
        # needed) is only to the next 16-row/tile boundary, not row_tile*128.
        flat = a.reshape(B, elems).astype(jnp.bfloat16)
        if elems_pad != elems:
            flat = jnp.pad(flat, ((0, 0), (0, elems_pad - elems)))
        return flat.reshape(B, rows_pad, LANES)

    x_p = pack(x_tok)
    n_p = pack(noise_tok)

    tile_spec = pl.BlockSpec((1, rt, LANES), lambda b, t: (b, t, 0))
    kernel = _make_diffusion_loss_kernel(elems, rt, needs_mask)

    return pl.pallas_call(
        kernel,
        out_shape=jax.ShapeDtypeStruct((B, 8, LANES), jnp.float32),
        grid_spec=pltpu.PrefetchScalarGridSpec(
            num_scalar_prefetch=0,
            grid=(B, n_tiles),
            in_specs=[
                pl.BlockSpec(memory_space=pltpu.MemorySpace.SMEM),  # per-batch scalars
                tile_spec,                                          # packed x tile (bf16)
                tile_spec,                                          # packed noise tile (bf16)
                pl.BlockSpec((LANES, LANES), lambda b, t: (0, 0)),  # block-diag weight (bf16)
                pl.BlockSpec((1, LANES), lambda b, t: (0, 0)),      # tiled bias (f32)
            ],
            out_specs=pl.BlockSpec((1, 8, LANES), lambda b, t: (b, 0, 0)),
        ),
        compiler_params=pltpu.CompilerParams(
            dimension_semantics=("parallel", "arbitrary"),
            vmem_limit_bytes=32 * 1024 * 1024),
    )(scalars.astype(jnp.float32), x_p, n_p,
      w_big.astype(jnp.bfloat16), bias_big.astype(jnp.float32))


# ----------------------------------------------------------------------------- #
# Engine wrapper (plain-JAX glue: param init, sigma sampling, scalings, weighting)
# ----------------------------------------------------------------------------- #
class SATVideoDiffusionEngineJAX:
    """JAX/Pallas stand-in for SATVideoDiffusionEngine's training forward()."""

    def __init__(self, channels=16, scale_factor=1.0, sigma_data=1.0,
                 p_mean=-1.2, p_std=1.2, seed=0, row_tile=4096):
        if LANES % channels != 0:
            raise ValueError("channels must divide 128")
        self.input_key = "mp4"
        self.scale_factor = scale_factor
        self.sigma_data = sigma_data
        self.p_mean = p_mean
        self.p_std = p_std
        self.row_tile = row_tile

        key = jax.random.PRNGKey(seed)
        kw, kb = jax.random.split(key)
        # Synthetic "network" parameters (deterministic init; no checkpoint load).
        # TODO(synk): the real network_config instantiates a full video DiT; a single
        # channel-wise linear layer stands in as the network here.
        self.w_net = (jax.random.normal(kw, (channels, channels), jnp.float32)
                      * (1.0 / math.sqrt(channels)))
        self.b_net = jax.random.normal(kb, (1, channels), jnp.float32) * 0.01
        # Lane-packed versions: 128//C tokens share one 128-lane row, so the network
        # weight becomes a block-diagonal 128x128 (native MXU shape) kept in bf16.
        pack = LANES // channels
        self.w_big = jnp.kron(jnp.eye(pack, dtype=jnp.float32),
                              self.w_net).astype(jnp.bfloat16)
        self.bias_big = jnp.tile(self.b_net, (1, pack))

    def get_input(self, batch):
        return batch[self.input_key]

    def _edm_scalings(self, sigma):
        sd = self.sigma_data
        c_skip = sd ** 2 / (sigma ** 2 + sd ** 2)
        c_out = sigma * sd / jnp.sqrt(sigma ** 2 + sd ** 2)
        c_in = 1.0 / jnp.sqrt(sigma ** 2 + sd ** 2)
        w = (sigma ** 2 + sd ** 2) / (sigma * sd) ** 2
        return c_in, c_skip, c_out, w

    def forward(self, x, batch, *, rng=None, noise=None, sigma=None):
        """x: latent video in channels-last layout [B, T, H, W, C] (token layout so
        the lane packing is a free contiguous reshape, no HBM transpose copy).
        Returns (loss_mean, loss_dict) like the PyTorch module."""
        B = x.shape[0]
        C = x.shape[-1]
        N = math.prod(x.shape[1:-1])

        if sigma is None or noise is None:
            if rng is None:
                raise ValueError("rng required when sigma or noise is not supplied")
            k_sig, k_noise = jax.random.split(rng)
        # EDM sigma sampler + scalings per batch element: tiny, stays in plain JAX.
        if sigma is None:
            sigma = jnp.exp(jax.random.normal(k_sig, (B,), jnp.float32)
                            * self.p_std + self.p_mean)
        if noise is None:
            # randn_like noise (plain-JAX; see TODO(synk) in the header re in-kernel PRNG)
            noise = jax.random.normal(k_noise, x.shape, jnp.float32)

        c_in, c_skip, c_out, w = self._edm_scalings(sigma)
        scalars = jnp.stack([sigma, c_skip, c_in * c_out, c_out], axis=1)      # [B, 4]

        x_tok = x.reshape(B, N, C)
        noise_tok = noise.reshape(B, N, C)

        partials = diffusion_loss_partial_sums(
            x_tok, noise_tok, scalars, self.w_big, self.bias_big,
            row_tile=self.row_tile)                                            # [B, 8, 128]

        # Per-batch weight + final mean are hoisted out of the kernel (O(B) work).
        per_batch_mse = partials.sum(axis=(1, 2)) / float(N * C)
        loss_mean = jnp.mean(w * per_batch_mse)
        return loss_mean, {"loss": loss_mean}


# ----------------------------------------------------------------------------- #
# Pure-JAX references for sanity checks
# ----------------------------------------------------------------------------- #
def _reference_loss_f32(engine, x, sigma, noise):
    """Full-f32 semantic reference (loose tolerance vs the bf16-streaming kernel)."""
    B, C = x.shape[0], x.shape[-1]
    xt = x.reshape(B, -1, C)
    nt = noise.reshape(B, -1, C)
    c_in, c_skip, c_out, w = engine._edm_scalings(sigma)
    noised = xt + nt * sigma[:, None, None]
    raw = jnp.einsum("bnc,cd->bnd", noised * c_in[:, None, None], engine.w_net)
    raw = raw + engine.b_net
    d_out = raw * c_out[:, None, None] + noised * c_skip[:, None, None]
    per_b = w * jnp.mean((d_out - xt) ** 2, axis=(1, 2))
    return jnp.mean(per_b)


def _reference_loss_bf16(engine, x, sigma, noise):
    """Reference that mimics the kernel's bf16 rounding points (tight tolerance)."""
    B, C = x.shape[0], x.shape[-1]
    f32 = jnp.float32
    rnd = lambda a: a.astype(jnp.bfloat16).astype(f32)
    xr = rnd(x.reshape(B, -1, C))
    nr = rnd(noise.reshape(B, -1, C))
    c_in, c_skip, c_out, w = engine._edm_scalings(sigma)
    ci_co = c_in * c_out
    noised = xr + nr * sigma[:, None, None]
    raw = jnp.einsum("bnc,cd->bnd", rnd(noised), rnd(engine.w_net))
    d_out = (raw * ci_co[:, None, None] + engine.b_net * c_out[:, None, None]
             + noised * c_skip[:, None, None])
    per_b = w * jnp.mean((d_out - xr) ** 2, axis=(1, 2))
    return jnp.mean(per_b)


if __name__ == "__main__":
    # Small shapes consistent with the module: latent video, channels-last [B,T,H,W,C].
    B, T, C, H, W = 2, 4, 16, 8, 8
    key = jax.random.PRNGKey(0)
    k_x, k_fwd, k_noise, k_sig = jax.random.split(key, 4)
    x = jax.random.normal(k_x, (B, T, H, W, C), jnp.float32)
    batch = {"mp4": x}   # input_key='mp4'
    # TODO(synk): conditioner / first_stage VAE / sampler are not on this loss hot
    # path and are not implemented here.

    engine = SATVideoDiffusionEngineJAX(channels=C, seed=0, row_tile=4096)

    # (1) Default forward: sigma + noise sampled internally (plain JAX RNG).
    loss_mean, loss_dict = engine.forward(x, batch, rng=k_fwd)
    loss_mean = jax.block_until_ready(loss_mean)
    assert bool(jnp.isfinite(loss_mean)) and float(loss_mean) > 0.0, float(loss_mean)

    # (2) Cross-check: explicit sigma + noise, single-tile path, vs references.
    sigma = jnp.exp(jax.random.normal(k_sig, (B,), jnp.float32) * engine.p_std
                    + engine.p_mean)
    noise = jax.random.normal(k_noise, x.shape, jnp.float32)
    loss_ext, _ = engine.forward(x, batch, noise=noise, sigma=sigma)
    loss_ext = jax.block_until_ready(loss_ext)
    ref_bf16 = float(_reference_loss_bf16(engine, x, sigma, noise))
    ref_f32 = float(_reference_loss_f32(engine, x, sigma, noise))
    assert abs(float(loss_ext) - ref_bf16) < 5e-3 * max(1.0, abs(ref_bf16)), (
        float(loss_ext), ref_bf16)
    assert abs(float(loss_ext) - ref_f32) < 2e-2 * max(1.0, abs(ref_f32)), (
        float(loss_ext), ref_f32)

    # (3) Multi-tile (unmasked) path: tiny row_tile forces several grid steps.
    engine_mt = SATVideoDiffusionEngineJAX(channels=C, seed=0, row_tile=16)
    loss_mt, _ = engine_mt.forward(x, batch, noise=noise, sigma=sigma)
    loss_mt = jax.block_until_ready(loss_mt)
    assert abs(float(loss_mt) - ref_bf16) < 5e-3 * max(1.0, abs(ref_bf16)), (
        float(loss_mt), ref_bf16)

    # (4) Padded / masked multi-tile path (rows not a multiple of 16*tiles).
    B2, T2 = 1, 5
    k_x2, k_n2, k_s2 = jax.random.split(jax.random.PRNGKey(1), 3)
    x2 = jax.random.normal(k_x2, (B2, T2, H, W, C), jnp.float32)
    noise2 = jax.random.normal(k_n2, x2.shape, jnp.float32)
    sigma2 = jnp.exp(jax.random.normal(k_s2, (B2,), jnp.float32) * engine.p_std
                     + engine.p_mean)
    loss_pad, _ = engine_mt.forward(x2, {"mp4": x2}, noise=noise2, sigma=sigma2)
    loss_pad = jax.block_until_ready(loss_pad)
    ref_pad = float(_reference_loss_bf16(engine_mt, x2, sigma2, noise2))
    assert abs(float(loss_pad) - ref_pad) < 5e-3 * max(1.0, abs(ref_pad)), (
        float(loss_pad), ref_pad)

    print("KERNEL_OK")
</pallas_src>

<mosaic_0001>
module attributes {stable_mosaic.version = 11 : i64} {
  func.func @kernel(%arg0: i32, %arg1: i32, %arg2: memref<2x4xf32, #tpu.memory_space<smem>>, %arg3: memref<1x32x128xbf16, #tpu.memory_space<vmem>>, %arg4: memref<1x32x128xbf16, #tpu.memory_space<vmem>>, %arg5: memref<128x128xbf16, #tpu.memory_space<vmem>>, %arg6: memref<1x128xf32, #tpu.memory_space<vmem>>, %arg7: memref<1x8x128xf32, #tpu.memory_space<vmem>>) attributes {dimension_semantics = [#tpu.dimension_semantics<parallel>, #tpu.dimension_semantics<arbitrary>], iteration_bounds = array<i64: 2, 1>, scalar_prefetch = 0 : i64, scratch_operands = 0 : i64, tpu.core_type = #tpu.core_type<tc>, window_params = [{transform_indices = @transform_0, window_bounds = array<i64: 2, 4>}, {transform_indices = @transform_1, window_bounds = array<i64: 1, 32, 128>}, {transform_indices = @transform_2, window_bounds = array<i64: 1, 32, 128>}, {pipeline_mode = #tpu.pipeline_mode<synchronous>, transform_indices = @transform_3, window_bounds = array<i64: 128, 128>}, {pipeline_mode = #tpu.pipeline_mode<synchronous>, transform_indices = @transform_4, window_bounds = array<i64: 1, 128>}, {transform_indices = @transform_5, window_bounds = array<i64: 1, 8, 128>}]} {
    %c0_i32 = arith.constant 0 : i32
    %0 = arith.cmpi eq, %arg1, %c0_i32 : i32
    %1 = arith.extui %0 : i1 to i32
    %c0_i32_0 = arith.constant 0 : i32
    %2 = arith.cmpi ne, %1, %c0_i32_0 : i32
    scf.if %2 {
      %cst_18 = arith.constant 0.000000e+00 : f32
      %43 = vector.broadcast %cst_18 : f32 to vector<1x8x128xf32>
      %c0_19 = arith.constant 0 : index
      %c0_20 = arith.constant 0 : index
      %c0_21 = arith.constant 0 : index
      %44 = vector.load %arg7[%c0_19, %c0_20, %c0_21] : memref<1x8x128xf32, #tpu.memory_space<vmem>>, vector<1x8x128xf32>
      tpu.vector_store %arg7[%c0_19, %c0_20, %c0_21], %43 {strides = array<i32>} : memref<1x8x128xf32, #tpu.memory_space<vmem>>, vector<1x8x128xf32>,
    } else {
    }
    %3 = arith.index_cast %arg0 : i32 to index
    %c0 = arith.constant 0 : index
    %4 = memref.load %arg2[%3, %c0] : memref<2x4xf32, #tpu.memory_space<smem>>
    %5 = arith.index_cast %arg0 : i32 to index
    %c1 = arith.constant 1 : index
    %6 = memref.load %arg2[%5, %c1] : memref<2x4xf32, #tpu.memory_space<smem>>
    %7 = arith.index_cast %arg0 : i32 to index
    %c2 = arith.constant 2 : index
    %8 = memref.load %arg2[%7, %c2] : memref<2x4xf32, #tpu.memory_space<smem>>
    %9 = arith.index_cast %arg0 : i32 to index
    %c3 = arith.constant 3 : index
    %10 = memref.load %arg2[%9, %c3] : memref<2x4xf32, #tpu.memory_space<smem>>
    %c0_1 = arith.constant 0 : index
    %c0_2 = arith.constant 0 : index
    %c0_3 = arith.constant 0 : index
    %11 = vector.load %arg3[%c0_1, %c0_2, %c0_3] : memref<1x32x128xbf16, #tpu.memory_space<vmem>>, vector<1x32x128xbf16>
    %12 = vector.shape_cast %11 : vector<1x32x128xbf16> to vector<32x128xbf16>
    %13 = arith.extf %12 : vector<32x128xbf16> to vector<32x128xf32>
    %c0_4 = arith.constant 0 : index
    %c0_5 = arith.constant 0 : index
    %c0_6 = arith.constant 0 : index
    %14 = vector.load %arg4[%c0_4, %c0_5, %c0_6] : memref<1x32x128xbf16, #tpu.memory_space<vmem>>, vector<1x32x128xbf16>
    %15 = vector.shape_cast %14 : vector<1x32x128xbf16> to vector<32x128xbf16>
    %16 = arith.extf %15 : vector<32x128xbf16> to vector<32x128xf32>
    %17 = vector.broadcast %4 : f32 to vector<32x128xf32>
    %18 = arith.mulf %16, %17 : vector<32x128xf32>
    %19 = arith.addf %13, %18 : vector<32x128xf32>
    %20 = arith.truncf %19 : vector<32x128xf32> to vector<32x128xbf16>
    %c0_7 = arith.constant 0 : index
    %c0_8 = arith.constant 0 : index
    %21 = vector.load %arg5[%c0_7, %c0_8] : memref<128x128xbf16, #tpu.memory_space<vmem>>, vector<128x128xbf16>
    %cst = arith.constant dense<0.000000e+00> : vector<32x128xf32>
    %22 = tpu.matmul %20, %21, %cst {dimension_numbers = #tpu.dot_dimension_numbers<[1], [0], [0], [1], [0, 0, 1, 1], [], []>} : vector<32x128xbf16>, vector<128x128xbf16>, vector<32x128xf32> -> vector<32x128xf32>
    %23 = vector.broadcast %8 : f32 to vector<32x128xf32>
    %24 = arith.mulf %22, %23 : vector<32x128xf32>
    %c0_9 = arith.constant 0 : index
    %c0_10 = arith.constant 0 : index
    %25 = vector.load %arg6[%c0_9, %c0_10] : memref<1x128xf32, #tpu.memory_space<vmem>>, vector<1x128xf32>
    %26 = vector.broadcast %10 : f32 to vector<1x128xf32>
    %27 = arith.mulf %25, %26 : vector<1x128xf32>
    %28 = vector.broadcast %27 : vector<1x128xf32> to vector<32x128xf32>
    %29 = arith.addf %24, %28 : vector<32x128xf32>
    %30 = vector.broadcast %6 : f32 to vector<32x128xf32>
    %31 = arith.mulf %19, %30 : vector<32x128xf32>
    %32 = arith.addf %29, %31 : vector<32x128xf32>
    %33 = arith.subf %32, %13 : vector<32x128xf32>
    %34 = arith.mulf %33, %33 : vector<32x128xf32>
    %c0_11 = arith.constant 0 : index
    %c0_12 = arith.constant 0 : index
    %c0_13 = arith.constant 0 : index
    %35 = vector.load %arg7[%c0_11, %c0_12, %c0_13] : memref<1x8x128xf32, #tpu.memory_space<vmem>>, vector<1x8x128xf32>
    %36 = vector.shape_cast %35 : vector<1x8x128xf32> to vector<8x128xf32>
    %37 = vector.shape_cast %34 : vector<32x128xf32> to vector<4x8x128xf32>
    %cst_14 = arith.constant dense<0.000000e+00> : vector<8x128xf32>
    %38 = vector.multi_reduction <add>, %37, %cst_14 [0] : vector<4x8x128xf32> to vector<8x128xf32>
    %39 = arith.addf %36, %38 : vector<8x128xf32>
    %c0_15 = arith.constant 0 : index
    %c0_16 = arith.constant 0 : index
    %c0_17 = arith.constant 0 : index
    %40 = vector.load %arg7[%c0_15, %c0_16, %c0_17] : memref<1x8x128xf32, #tpu.memory_space<vmem>>, vector<1x8x128xf32>
    %41 = vector.shape_cast %40 : vector<1x8x128xf32> to vector<8x128xf32>
    %42 = vector.shape_cast %39 : vector<8x128xf32> to vector<1x8x128xf32>
    tpu.vector_store %arg7[%c0_15, %c0_16, %c0_17], %42 {strides = array<i32>} : memref<1x8x128xf32, #tpu.memory_space<vmem>>, vector<1x8x128xf32>,
    return
  }
  func.func @transform_0(%arg0: i32, %arg1: i32) -> (i32, i32) {
    %c0_i32 = arith.constant 0 : i32
    %c0_i32_0 = arith.constant 0 : i32
    %c0_i32_1 = arith.constant 0 : i32
    return %c0_i32, %c0_i32_0 : i32, i32
  }
  func.func @transform_1(%arg0: i32, %arg1: i32) -> (i32, i32, i32) {
    %c0_i32 = arith.constant 0 : i32
    %c0_i32_0 = arith.constant 0 : i32
    return %arg0, %arg1, %c0_i32 : i32, i32, i32
  }
  func.func @transform_2(%arg0: i32, %arg1: i32) -> (i32, i32, i32) {
    %c0_i32 = arith.constant 0 : i32
    %c0_i32_0 = arith.constant 0 : i32
    return %arg0, %arg1, %c0_i32 : i32, i32, i32
  }
  func.func @transform_3(%arg0: i32, %arg1: i32) -> (i32, i32) {
    %c0_i32 = arith.constant 0 : i32
    %c0_i32_0 = arith.constant 0 : i32
    %c0_i32_1 = arith.constant 0 : i32
    return %c0_i32, %c0_i32_0 : i32, i32
  }
  func.func @transform_4(%arg0: i32, %arg1: i32) -> (i32, i32) {
    %c0_i32 = arith.constant 0 : i32
    %c0_i32_0 = arith.constant 0 : i32
    %c0_i32_1 = arith.constant 0 : i32
    return %c0_i32, %c0_i32_0 : i32, i32
  }
  func.func @transform_5(%arg0: i32, %arg1: i32) -> (i32, i32, i32) {
    %c0_i32 = arith.constant 0 : i32
    %c0_i32_0 = arith.constant 0 : i32
    %c0_i32_1 = arith.constant 0 : i32
    return %arg0, %c0_i32, %c0_i32_0 : i32, i32, i32
  }
}

</mosaic_0001>

<llo_original>
// kernel: tpu_custom_call.1
$region0: #{tpu_custom_call.1}
  #allocation0 [shape = 'u32[]', space=smem, size = 0x4, offset = 0x4, fixed_abs, tag = 'smem constant byte address 0x4 - core index']
  #allocation1 [shape = 'u32[144,128]{1,0:T(1,128)}', space=vmem, size = 0x12000, scoped, tag = 'internal scratch']
  %s0 = inlined_call_operand.hbm [shape: f32[2,4], index: 0, kind: input, shape index: {}]
  %s1 = inlined_call_operand.hbm [shape: bf16[2,32,128], index: 1, kind: input, shape index: {}]
  %s2 = inlined_call_operand.hbm [shape: bf16[2,32,128], index: 2, kind: input, shape index: {}]
  %s3 = inlined_call_operand.hbm [shape: bf16[128,128], index: 3, kind: input, shape index: {}]
  %s4 = inlined_call_operand.vmem [shape: f32[1,128], index: 4, kind: input, shape index: {}]
  %s5 = inlined_call_operand.hbm [shape: f32[2,8,128], index: 5, kind: output, shape index: {}]
  %s6 = sld [smem:[#allocation0]]
  $region73: #{tpu_custom_call.1} parent=0
    _
  %s8 = ssub.s32 1, %s6
  %s9 = scalar_select 0, %s8, %s6
  $region1: #{tpu_custom_call.1} parent=0
    #allocation2 [shape = 'u8[1024]{0}', space=smem, size = 0x400, scoped, tag = 'input window, operand 0, single buffered']
    #allocation3 [shape = 's32[2]{0}', space=sflag, size = 0x8, scoped, tag = 'scoped memory for tpu_custom_call.1']
    #allocation4 [shape = 's32[2]{0}', space=sflag, size = 0x8, scoped, tag = 'scoped memory for tpu_custom_call.1']
    #allocation5 [shape = 's32[2]{0}', space=sflag, size = 0x8, scoped, tag = 'scoped memory for tpu_custom_call.1']
    #allocation6 [shape = 'u8[16384]{0}', space=vmem, size = 0x4000, scoped, tag = 'input window, operand 1']
    #allocation7 [shape = 'u8[16384]{0}', space=vmem, size = 0x4000, scoped, tag = 'input window, operand 2']
    #allocation8 [shape = 's32[2]{0}', space=sflag, size = 0x8, scoped, tag = 'scoped memory for tpu_custom_call.1']
    #allocation9 [shape = 'u8[32768]{0}', space=vmem, size = 0x8000, scoped, tag = 'input window, operand 3, single buffered']
    #allocation10 [shape = 'u8[8192]{0}', space=vmem, size = 0x2000, scoped, tag = 'output window, operand 0']
    %10 = vsyncpa [#allocation5], 0
    %11 = vsyncpa [#allocation3], 0
    %s12 = scalar_lea.sflag [#allocation3], 1
    %13 = vsyncpa %s12, 0
    %14 = vsyncpa [#allocation8], 0
    %s15 = scalar_lea.sflag [#allocation8], 1
    %16 = vsyncpa %s15, 0
    %17 = vsyncpa [#allocation4], 0
    %s18 = scalar_lea.sflag [#allocation4], 1
    %19 = vsyncpa %s18, 0
    loop: start=0, step=1, limit=4
    $region2: #{tpu_custom_call.1} parent=1 // loop_pre_header
      _
    $region3: #{tpu_custom_call.1} parent=1 // loop_header
      %s21 = sphi 0, %s25
      %p22 = scmp.ge.s32.totalorder %s21, 4
      %s28 = sphi 0, %s40
      %s29 = sphi 0, %s36
      %s30 = sphi 0, %s28
      %s31 = sphi 0, %s29
      %s32 = sphi 0, %s30
      %s33 = sphi 0, %s31
      %s41 = sphi 0, %s41
      %s43 = sphi 0, %s41
      %s44 = sphi 0, %s43
      %s58 = sphi 0, %s44
      %s66 = sphi 0, %s68
      %s69 = sphi 0, %s66
      %s70 = sphi 0, %s69
      %s86 = sphi 0, %s70
      %s94 = sphi 0, %s96
      %s97 = sphi 0, %s94
      %s98 = sphi 0, %s97
      %s114 = sphi 0, %s98
      %s118 = sphi 0, %s118
      %s120 = sphi 0, %s118
      %s121 = sphi 0, %s120
      %s135 = sphi 0, %s121
      %s139 = sphi 0, %s139
      %s141 = sphi 0, %s139
      %s142 = sphi 0, %s141
      %s156 = sphi 0, %s142
      %s162 = sphi 0, %s164
      %s165 = sphi 0, %s162
      %s166 = sphi 0, %s165
      %s182 = sphi 0, %s166
    $region4: #{tpu_custom_call.1} parent=1 // loop_header_branch
      %24 = sbr.rel (%p22) target = $region8
    $region5: #{tpu_custom_call.1} parent=1 // loop_body
      %s26 = ssub.s32 %s21, 1
      %s27 = ssub.s32 %s21, 2
      %s34 = sadd.s32 1, %s29
      %p35 = scmp.ge.s32.totalorder %s34, 1
      %s36 = scalar_select %p35, 0, %s34
      %s37 = sadd.s32 1, %s28
      %s38 = scalar_select %p35, %s37, %s28
      %p39 = scmp.ge.s32.totalorder %s38, 2
      %s40 = scalar_select %p39, 0, %s38
      %s42 = sadd.s32 %s41, 1
      %p45 = scmp.eq.s32.totalorder %s21, 1
      %p46 = scmp.ne.s32.totalorder %s41, %s43
      %p47 = scmp.eq.s32.totalorder %s21, 0
      %p48 = por %p46, %p47
      %p49 = scmp.ne.s32.totalorder %s41, %s43
      %p50 = scmp.eq.s32.totalorder %s26, 1
      %p51 = por %p49, %p50
      %p52 = scmp.ne.s32.totalorder %s43, %s44
      %p53 = scmp.eq.s32.totalorder %s26, 0
      %p54 = por %p52, %p53
      %p55 = scmp.ne.s32.totalorder %s43, %s44
      %p56 = scmp.eq.s32.totalorder %s27, 1
      %p57 = por %p55, %p56
      %p59 = scmp.ne.s32.totalorder %s44, %s58
      %p60 = scmp.eq.s32.totalorder %s27, 0
      %p61 = por %p59, %p60
      %s62 = ssub.s32 %s28, %s40
      %s63 = ssub.s32 %s29, %s36
      %s64 = sor.u32 %s62, %s63
      %p65 = scmp.eq.s32.totalorder %s64, 0
      %s67 = sadd.s32 %s66, 1
      %s68 = scalar_select %p65, %s66, %s67
      %p71 = pneg %p65
      %p72 = scmp.eq.s32.totalorder %s21, 1
      %p73 = por %p71, %p72
      %p74 = scmp.ne.s32.totalorder %s66, %s69
      %p75 = scmp.eq.s32.totalorder %s21, 0
      %p76 = por %p74, %p75
      %p77 = scmp.ne.s32.totalorder %s66, %s69
      %p78 = scmp.eq.s32.totalorder %s26, 1
      %p79 = por %p77, %p78
      %p80 = scmp.ne.s32.totalorder %s69, %s70
      %p81 = scmp.eq.s32.totalorder %s26, 0
      %p82 = por %p80, %p81
      %p83 = scmp.ne.s32.totalorder %s69, %s70
      %p84 = scmp.eq.s32.totalorder %s27, 1
      %p85 = por %p83, %p84
      %p87 = scmp.ne.s32.totalorder %s70, %s86
      %p88 = scmp.eq.s32.totalorder %s27, 0
      %p89 = por %p87, %p88
      %s90 = ssub.s32 %s28, %s40
      %s91 = ssub.s32 %s29, %s36
      %s92 = sor.u32 %s90, %s91
      %p93 = scmp.eq.s32.totalorder %s92, 0
      %s95 = sadd.s32 %s94, 1
      %s96 = scalar_select %p93, %s94, %s95
      %p99 = pneg %p93
      %p100 = scmp.eq.s32.totalorder %s21, 1
      %p101 = por %p99, %p100
      %p102 = scmp.ne.s32.totalorder %s94, %s97
      %p103 = scmp.eq.s32.totalorder %s21, 0
      %p104 = por %p102, %p103
      %p105 = scmp.ne.s32.totalorder %s94, %s97
      %p106 = scmp.eq.s32.totalorder %s26, 1
      %p107 = por %p105, %p106
      %p108 = scmp.ne.s32.totalorder %s97, %s98
      %p109 = scmp.eq.s32.totalorder %s26, 0
      %p110 = por %p108, %p109
      %p111 = scmp.ne.s32.totalorder %s97, %s98
      %p112 = scmp.eq.s32.totalorder %s27, 1
      %p113 = por %p111, %p112
      %p115 = scmp.ne.s32.totalorder %s98, %s114
      %p116 = scmp.eq.s32.totalorder %s27, 0
      %p117 = por %p115, %p116
      %s119 = sadd.s32 %s118, 1
      %p122 = scmp.eq.s32.totalorder %s21, 1
      %p123 = scmp.ne.s32.totalorder %s118, %s120
      %p124 = scmp.eq.s32.totalorder %s21, 0
      %p125 = por %p123, %p124
      %p126 = scmp.ne.s32.totalorder %s118, %s120
      %p127 = scmp.eq.s32.totalorder %s26, 1
      %p128 = por %p126, %p127
      %p129 = scmp.ne.s32.totalorder %s120, %s121
      %p130 = scmp.eq.s32.totalorder %s26, 0
      %p131 = por %p129, %p130
      %p132 = scmp.ne.s32.totalorder %s120, %s121
      %p133 = scmp.eq.s32.totalorder %s27, 1
      %p134 = por %p132, %p133
      %p136 = scmp.ne.s32.totalorder %s121, %s135
      %p137 = scmp.eq.s32.totalorder %s27, 0
      %p138 = por %p136, %p137
      %s140 = sadd.s32 %s139, 1
      %p143 = scmp.eq.s32.totalorder %s21, 1
      %p144 = scmp.ne.s32.totalorder %s139, %s141
      %p145 = scmp.eq.s32.totalorder %s21, 0
      %p146 = por %p144, %p145
      %p147 = scmp.ne.s32.totalorder %s139, %s141
      %p148 = scmp.eq.s32.totalorder %s26, 1
      %p149 = por %p147, %p148
      %p150 = scmp.ne.s32.totalorder %s141, %s142
      %p151 = scmp.eq.s32.totalorder %s26, 0
      %p152 = por %p150, %p151
      %p153 = scmp.ne.s32.totalorder %s141, %s142
      %p154 = scmp.eq.s32.totalorder %s27, 1
      %p155 = por %p153, %p154
      %p157 = scmp.ne.s32.totalorder %s142, %s156
      %p158 = scmp.eq.s32.totalorder %s27, 0
      %p159 = por %p157, %p158
      %s160 = ssub.s32 %s28, %s40
      %p161 = scmp.eq.s32.totalorder %s160, 0
      %s163 = sadd.s32 %s162, 1
      %s164 = scalar_select %p161, %s162, %s163
      %p167 = pneg %p161
      %p168 = scmp.eq.s32.totalorder %s21, 1
      %p169 = por %p167, %p168
      %p170 = scmp.ne.s32.totalorder %s162, %s165
      %p171 = scmp.eq.s32.totalorder %s21, 0
      %p172 = por %p170, %p171
      %p173 = scmp.ne.s32.totalorder %s162, %s165
      %p174 = scmp.eq.s32.totalorder %s26, 1
      %p175 = por %p173, %p174
      %p176 = scmp.ne.s32.totalorder %s165, %s166
      %p177 = scmp.eq.s32.totalorder %s26, 0
      %p178 = por %p176, %p177
      %p179 = scmp.ne.s32.totalorder %s165, %s166
      %p180 = scmp.eq.s32.totalorder %s27, 1
      %p181 = por %p179, %p180
      %p183 = scmp.ne.s32.totalorder %s166, %s182
      %p184 = scmp.eq.s32.totalorder %s27, 0
      %p185 = por %p183, %p184
      %p186 = scmp.le.s32.totalorder 1, %s21
      %p187 = scmp.lt.s32.totalorder %s21, 3
      %p188 = pnand %p186, %p187
      %p189 = pneg %p188
      // Predicated region
      $region9: #{tpu_custom_call.1} parent=5 // pred_check
        _
      $region10: #{tpu_custom_call.1} parent=5 // pred_check_branch
        %191 = sbr.rel (%p188) target = $region12
      $region11: #{tpu_custom_call.1} parent=5 // pred_region
        %s192 = ssub.s32 %s21, 1
        // Predicated region
        $region13: #{tpu_custom_call.1} parent=11 // pred_check
          %p193 = pneg %p54
        $region14: #{tpu_custom_call.1} parent=11 // pred_check_branch
          %195 = sbr.rel (%p193) target = $region16
        $region15: #{tpu_custom_call.1} parent=11 // pred_region
          %s197 = ssub.s32 32, 32
          %198 = vsyncadd [#allocation5], %s197
          %201 = dma.hbm_to_smem %s0, 32, [#allocation2], [#allocation5]
        $region16: #{tpu_custom_call.1} parent=11 // pred_fallthru
          _
        // Predicated region
        $region17: #{tpu_custom_call.1} parent=11 // pred_check
          %p202 = pneg %p131
        $region18: #{tpu_custom_call.1} parent=11 // pred_check_branch
          %204 = sbr.rel (%p202) target = $region20
        $region19: #{tpu_custom_call.1} parent=11 // pred_region
          %s206 = ssub.s32 1024, 1024
          %207 = vsyncadd [#allocation8], %s206
          %s208 = sshll.u32 [#allocation9], 4
          %s209 = int_to_ptr.vmem [resolvable:$true] %s208
          %214 = dma.hbm_to_vmem [thread:$0]  %s3, 1024, %s209, [#allocation8], 64, 64, 4
        $region20: #{tpu_custom_call.1} parent=11 // pred_fallthru
          _
        // Predicated region
        $region21: #{tpu_custom_call.1} parent=11 // pred_check
          %p215 = pneg %p152
        $region22: #{tpu_custom_call.1} parent=11 // pred_check_branch
          %217 = sbr.rel (%p215) target = $region24
        $region23: #{tpu_custom_call.1} parent=11 // pred_region
          _
        $region24: #{tpu_custom_call.1} parent=11 // pred_fallthru
          _
      $region12: #{tpu_custom_call.1} parent=5 // pred_fallthru
        _
      %p218 = scmp.lt.s32.totalorder %s21, 2
      // Predicated region
      $region25: #{tpu_custom_call.1} parent=5 // pred_check
        %p219 = pneg %p218
      $region26: #{tpu_custom_call.1} parent=5 // pred_check_branch
        %221 = sbr.rel (%p219) target = $region28
      $region27: #{tpu_custom_call.1} parent=5 // pred_region
        // Predicated region
        $region29: #{tpu_custom_call.1} parent=27 // pred_check
          %p222 = pneg %p76
        $region30: #{tpu_custom_call.1} parent=27 // pred_check_branch
          %224 = sbr.rel (%p222) target = $region32
        $region31: #{tpu_custom_call.1} parent=27 // pred_region
          %s225 = sand.u32 %s66, 1
          %s226 = scalar_lea.sflag [#allocation3], %s225
          %s227 = sand.u32 %s66, 1
          %s228 = smul.addr %s227, 16
          %s229 = scalar_lea.vmem [#allocation6], %s228
          %s230 = smul.u32 4, %s29
          %s232 = ssub.s32 256, 256
          %233 = vsyncadd %s226, %s232
          %s234 = smul.addr %s28, 4
          %s235 = sadd.s32 %s230, %s234
          %s236 = smul.addr %s235, 64
          %s237 = scalar_lea.hbm %s1, %s236
          %s238 = sshll.u32 %s229, 4
          %s239 = int_to_ptr.vmem [resolvable:$true] %s238
          %244 = dma.hbm_to_vmem [thread:$0]  %s237, 256, %s239, %s226, 64, 64, 4
        $region32: #{tpu_custom_call.1} parent=27 // pred_fallthru
          _
        // Predicated region
        $region33: #{tpu_custom_call.1} parent=27 // pred_check
          %p245 = pneg %p104
        $region34: #{tpu_custom_call.1} parent=27 // pred_check_branch
          %247 = sbr.rel (%p245) target = $region36
        $region35: #{tpu_custom_call.1} parent=27 // pred_region
          %s248 = sand.u32 %s21, 1
          %s249 = scalar_lea.sflag [#allocation8], %s248
          %s250 = sand.u32 %s94, 1
          %s251 = smul.addr %s250, 16
          %s252 = scalar_lea.vmem [#allocation7], %s251
          %s253 = smul.u32 4, %s29
          %s255 = ssub.s32 256, 256
          %256 = vsyncadd %s249, %s255
          %s257 = smul.addr %s28, 4
          %s258 = sadd.s32 %s253, %s257
          %s259 = smul.addr %s258, 64
          %s260 = scalar_lea.hbm %s2, %s259
          %s261 = sshll.u32 %s252, 4
          %s262 = int_to_ptr.vmem [resolvable:$true] %s261
          %267 = dma.hbm_to_vmem [thread:$0]  %s260, 256, %s262, %s249, 64, 64, 4
        $region36: #{tpu_custom_call.1} parent=27 // pred_fallthru
          _
      $region28: #{tpu_custom_call.1} parent=5 // pred_fallthru
        _
      %p268 = scmp.le.s32.totalorder 1, %s21
      %p269 = scmp.lt.s32.totalorder %s21, 3
      %p270 = pnand %p268, %p269
      %p271 = pneg %p270
      // Predicated region
      $region37: #{tpu_custom_call.1} parent=5 // pred_check
        _
      $region38: #{tpu_custom_call.1} parent=5 // pred_check_branch
        %273 = sbr.rel (%p270) target = $region40
      $region39: #{tpu_custom_call.1} parent=5 // pred_region
        %s274 = ssub.s32 %s21, 1
        // Predicated region
        $region41: #{tpu_custom_call.1} parent=39 // pred_check
          %p275 = pneg %p54
        $region42: #{tpu_custom_call.1} parent=39 // pred_check_branch
          %277 = sbr.rel (%p275) target = $region44
        $region43: #{tpu_custom_call.1} parent=39 // pred_region
          %278 = dma.done [#allocation5], 32
        $region44: #{tpu_custom_call.1} parent=39 // pred_fallthru
          _
        %s279 = sand.u32 %s69, 1
        %s280 = scalar_lea.sflag [#allocation3], %s279
        %s281 = sand.u32 %s69, 1
        %s282 = smul.addr %s281, 16
        %s283 = scalar_lea.vmem [#allocation6], %s282
        // Predicated region
        $region45: #{tpu_custom_call.1} parent=39 // pred_check
          %p284 = pneg %p82
        $region46: #{tpu_custom_call.1} parent=39 // pred_check_branch
          %286 = sbr.rel (%p284) target = $region48
        $region47: #{tpu_custom_call.1} parent=39 // pred_region
          %287 = dma.done %s280, 256
        $region48: #{tpu_custom_call.1} parent=39 // pred_fallthru
          _
        %s288 = sand.u32 %s26, 1
        %s289 = scalar_lea.sflag [#allocation8], %s288
        %s290 = sand.u32 %s97, 1
        %s291 = smul.addr %s290, 16
        %s292 = scalar_lea.vmem [#allocation7], %s291
        // Predicated region
        $region49: #{tpu_custom_call.1} parent=39 // pred_check
          %p293 = pneg %p110
        $region50: #{tpu_custom_call.1} parent=39 // pred_check_branch
          %295 = sbr.rel (%p293) target = $region52
        $region51: #{tpu_custom_call.1} parent=39 // pred_region
          %296 = dma.done %s289, 256
        $region52: #{tpu_custom_call.1} parent=39 // pred_fallthru
          _
        // Predicated region
        $region53: #{tpu_custom_call.1} parent=39 // pred_check
          %p297 = pneg %p131
        $region54: #{tpu_custom_call.1} parent=39 // pred_check_branch
          %299 = sbr.rel (%p297) target = $region56
        $region55: #{tpu_custom_call.1} parent=39 // pred_region
          %300 = dma.done [#allocation8], 1024
        $region56: #{tpu_custom_call.1} parent=39 // pred_fallthru
          _
        %301 = sfence
        %p302 = pneg %p54
        %p303 = pneg %p51
        %s304 = sand.u32 %s69, 1
        %s305 = scalar_lea.sflag [#allocation3], %s304
        %s306 = sand.u32 %s69, 1
        %s307 = smul.addr %s306, 16
        %s308 = scalar_lea.vmem [#allocation6], %s307
        %p309 = pneg %p82
        %p310 = pneg %p79
        %s311 = sand.u32 %s26, 1
        %s312 = scalar_lea.sflag [#allocation8], %s311
        %s313 = sand.u32 %s97, 1
        %s314 = smul.addr %s313, 16
        %s315 = scalar_lea.vmem [#allocation7], %s314
        %p316 = pneg %p110
        %p317 = pneg %p107
        %p318 = pneg %p131
        %p319 = pneg %p128
        %p320 = pneg %p152
        %p321 = pneg %p149
        %p322 = pneg %p178
        %p323 = pneg %p175
        %s324 = sand.u32 %s165, 1
        %s325 = scalar_lea.sflag [#allocation4], %s324
        %s326 = sand.u32 %s165, 1
        %s327 = smul.addr %s326, 8
        %s328 = scalar_lea.vmem [#allocation10], %s327
        %s329 = smul.u32 4, %s31
        %s330 = smul.u32 4, %s31
        %p332 = scmp.eq.s32.totalorder %s31, 0
        // Predicated region
        $region57: #{tpu_custom_call.1} parent=39 // pred_check
          %p333 = pneg %p332
        $region58: #{tpu_custom_call.1} parent=39 // pred_check_branch
          %335 = sbr.rel (%p333) target = $region60
        $region59: #{tpu_custom_call.1} parent=39 // pred_region
          %336 = vst [vmem:[%s328] sm:$0xff] 0.0
        $region60: #{tpu_custom_call.1} parent=39 // pred_fallthru
          _
        %s337 = smul.u32 %s30, 128
        %s338 = sld [smem:[#allocation2 + %s337]]
        %s339 = sadd.s32 %s337, 1
        %s340 = sld [smem:[#allocation2 + %s339]]
        %s341 = sadd.s32 %s337, 2
        %s342 = sld [smem:[#allocation2 + %s341]]
        %s343 = sadd.s32 %s337, 3
        %s344 = sld [smem:[#allocation2 + %s343]]
        %v345 = vld [vmem:[%s283] sm:$0xf]
        %v346 = vld [vmem:[%s283 + $0x4] sm:$0xf]
        %v347 = vld [vmem:[%s283 + $0x8] sm:$0xf]
        %v348 = vld [vmem:[%s283 + $0xc] sm:$0xf]
        %v349 = vunpack.c.l.bf16 %v345
        %v350 = vunpack.c.l.bf16 %v346
        %v351 = vunpack.c.l.bf16 %v347
        %v352 = vunpack.c.l.bf16 %v348
        %v353 = vld [vmem:[%s292] sm:$0xf]
        %v354 = vld [vmem:[%s292 + $0x4] sm:$0xf]
        %v355 = vld [vmem:[%s292 + $0x8] sm:$0xf]
        %v356 = vld [vmem:[%s292 + $0xc] sm:$0xf]
        %v357 = vunpack.c.l.bf16 %v353
        %v358 = vunpack.c.l.bf16 %v354
        %v359 = vunpack.c.l.bf16 %v355
        %v360 = vunpack.c.l.bf16 %v356
        %v361 = vstv %s338
        %v362 = vmul.f32 %v357, %v361
        %v363 = vmul.f32 %v358, %v361
        %v364 = vmul.f32 %v359, %v361
        %v365 = vmul.f32 %v360, %v361
        %v366 = vadd.f32 %v349, %v362
        %v367 = vadd.f32 %v350, %v363
        %v368 = vadd.f32 %v351, %v364
        %v369 = vadd.f32 %v352, %v365
        %v370 = vpack.c.bf16 %v367, %v366
        %v371 = vpack.c.bf16 %v369, %v368
        %v372 = vld [vmem:[#allocation9] sm:$0xf]
        %v373 = vld [vmem:[#allocation9 + $0x4] sm:$0xf]
        %v374 = vld [vmem:[#allocation9 + $0x8] sm:$0xf]
        %v375 = vld [vmem:[#allocation9 + $0xc] sm:$0xf]
        %v376 = vld [vmem:[#allocation9 + $0x10] sm:$0xf]
        %v377 = vld [vmem:[#allocation9 + $0x14] sm:$0xf]
        %v378 = vld [vmem:[#allocation9 + $0x18] sm:$0xf]
        %v379 = vld [vmem:[#allocation9 + $0x1c] sm:$0xf]
        %v380 = vld [vmem:[#allocation9 + $0x20] sm:$0xf]
        %v381 = vld [vmem:[#allocation9 + $0x24] sm:$0xf]
        %v382 = vld [vmem:[#allocation9 + $0x28] sm:$0xf]
        %v383 = vld [vmem:[#allocation9 + $0x2c] sm:$0xf]
        %v384 = vld [vmem:[#allocation9 + $0x30] sm:$0xf]
        %v385 = vld [vmem:[#allocation9 + $0x34] sm:$0xf]
        %v386 = vld [vmem:[#allocation9 + $0x38] sm:$0xf]
        %v387 = vld [vmem:[#allocation9 + $0x3c] sm:$0xf]
        %v404 = vunpack.c.l.b16 %v372
        %v405 = vunpack.c.l.b16 %v373
        %v406 = vunpack.c.l.b16 %v374
        %v407 = vunpack.c.l.b16 %v375
        %v408 = vunpack.c.l.b16 %v376
        %v409 = vunpack.c.l.b16 %v377
        %v410 = vunpack.c.l.b16 %v378
        %v411 = vunpack.c.l.b16 %v379
        %v412 = vunpack.c.l.b16 %v380
        %v413 = vunpack.c.l.b16 %v381
        %v414 = vunpack.c.l.b16 %v382
        %v415 = vunpack.c.l.b16 %v383
        %v416 = vunpack.c.l.b16 %v384
        %v417 = vunpack.c.l.b16 %v385
        %v418 = vunpack.c.l.b16 %v386
        %v419 = vunpack.c.l.b16 %v387
        %v420 = vpack.c.b16 %v405, %v404
        %v421 = vpack.c.b16 %v407, %v406
        %v422 = vpack.c.b16 %v409, %v408
        %v423 = vpack.c.b16 %v411, %v410
        %v424 = vpack.c.b16 %v413, %v412
        %v425 = vpack.c.b16 %v415, %v414
        %v426 = vpack.c.b16 %v417, %v416
        %v427 = vpack.c.b16 %v419, %v418
        %436 = vmatprep.subr.bf16.mxu0 0
        %437 = vmatpush1.bf16.msra.mxu0 %v420
        %438 = vmatprep.subr.bf16.mxu0 0
        %439 = vmatpush1.bf16.msra.mxu0 %v421
        %440 = vmatprep.subr.bf16.mxu0 0
        %441 = vmatpush1.bf16.msra.mxu0 %v422
        %442 = vmatprep.subr.bf16.mxu0 0
        %443 = vmatpush1.bf16.msra.mxu0 %v423
        %444 = vmatprep.subr.bf16.mxu0 0
        %445 = vmatpush1.bf16.msra.mxu0 %v424
        %446 = vmatprep.subr.bf16.mxu0 0
        %447 = vmatpush1.bf16.msra.mxu0 %v425
        %448 = vmatprep.subr.bf16.mxu0 0
        %449 = vmatpush1.bf16.msra.mxu0 %v426
        %450 = vmatprep.subr.bf16.mxu0 0
        %451 = vmatpush1.bf16.msra.mxu0 %v427
        %452 = vmatprep.subr.bf16.mxu0 0
        %453 = vmatpush1.bf16.msra.mxu0 0
        %454 = vmatprep.subr.bf16.mxu0 0
        %455 = vmatpush1.bf16.msra.mxu0 0
        %456 = vmatprep.subr.bf16.mxu0 0
        %457 = vmatpush1.bf16.msra.mxu0 0
        %458 = vmatprep.subr.bf16.mxu0 0
        %459 = vmatpush1.bf16.msra.mxu0 0
        %460 = vmatprep.subr.bf16.mxu0 0
        %461 = vmatpush1.bf16.msra.mxu0 0
        %462 = vmatprep.subr.bf16.mxu0 0
        %463 = vmatpush1.bf16.msra.mxu0 0
        %464 = vmatprep.subr.bf16.mxu0 0
        %465 = vmatpush1.bf16.msra.mxu0 0
        %466 = vmatprep.subr.bf16.mxu0 0
        %467 = vmatpush1.bf16.msra.mxu0 0
        %468 = vmatprep.mubr.bf16.mxu0 0
        %469 = vmatmul.mubr.bf16.gmra.mrb[0].mxu0 %v370
        %v470 = vpop.f32.mrb[0].mxu0
        %v471 = vadd.f32 0.0, %v470
        %v472 = vpop.f32.mrb[0].mxu0
        %v473 = vpop.f32.mrb[0].mxu0
        %v474 = vadd.f32 0.0, %v473
        %v475 = vpop.f32.mrb[0].mxu0
        %476 = vmatprep.mubr.bf16.mxu0 0
        %477 = vmatmul.mubr.bf16.gmra.mrb[0].mxu0 %v371
        %v478 = vpop.f32.mrb[0].mxu0
        %v479 = vadd.f32 0.0, %v478
        %v480 = vpop.f32.mrb[0].mxu0
        %v481 = vpop.f32.mrb[0].mxu0
        %v482 = vadd.f32 0.0, %v481
        %v483 = vpop.f32.mrb[0].mxu0
        %484 = vdwg.mxu0
        %v485 = vstv %s342
        %v486 = vmul.f32 %v471, %v485
        %v487 = vmul.f32 %v474, %v485
        %v488 = vmul.f32 %v479, %v485
        %v489 = vmul.f32 %v482, %v485
        %v490 = vld [vmem:[%s4] sm:$0x1]
        %v491 = vstv %s344
        %v492 = vmul.f32 %v490, %v491
        %v494 = vlaneseq
        %v495 = vshrl.u32 %v494, 7
        %v496 = vsub.s32 0, %v495
        %v497 = vrot.slane %v492, %v496
        %v499 = vadd.f32 %v486, %v497
        %v500 = vadd.f32 %v487, %v497
        %v501 = vadd.f32 %v488, %v497
        %v502 = vadd.f32 %v489, %v497
        %v503 = vstv %s340
        %v504 = vmul.f32 %v366, %v503
        %v505 = vmul.f32 %v367, %v503
        %v506 = vmul.f32 %v368, %v503
        %v507 = vmul.f32 %v369, %v503
        %v508 = vadd.f32 %v499, %v504
        %v509 = vadd.f32 %v500, %v505
        %v510 = vadd.f32 %v501, %v506
        %v511 = vadd.f32 %v502, %v507
        %v512 = vsub.f32 %v508, %v349
        %v513 = vsub.f32 %v509, %v350
        %v514 = vsub.f32 %v510, %v351
        %v515 = vsub.f32 %v511, %v352
        %v516 = vmul.f32 %v512, %v512
        %v517 = vmul.f32 %v513, %v513
        %v518 = vmul.f32 %v514, %v514
        %v519 = vmul.f32 %v515, %v515
        %v520 = vld [vmem:[%s328] sm:$0xff]
        %v521 = vadd.f32 %v516, %v517
        %v522 = vadd.f32 %v521, %v518
        %v523 = vadd.f32 %v522, %v519
        %v524 = vadd.f32 %v520, %v523
        %525 = vst [vmem:[%s328] sm:$0xff] %v524
        %s526 = sand.u32 %s165, 1
        %s527 = scalar_lea.sflag [#allocation4], %s526
        %s528 = sand.u32 %s165, 1
        %s529 = smul.addr %s528, 8
        %s530 = scalar_lea.vmem [#allocation10], %s529
        // Predicated region
        $region61: #{tpu_custom_call.1} parent=39 // pred_check
          %p531 = pneg %p175
        $region62: #{tpu_custom_call.1} parent=39 // pred_check_branch
          %533 = sbr.rel (%p531) target = $region64
        $region63: #{tpu_custom_call.1} parent=39 // pred_region
          %s535 = ssub.s32 128, 128
          %536 = vsyncadd %s527, %s535
          %s537 = smul.addr %s30, 128
          %s538 = scalar_lea.hbm %s5, %s537
          %s540 = sshll.u32 %s530, 4
          %s541 = int_to_ptr.vmem [resolvable:$true] %s540
          %543 = dma.vmem_to_hbm [thread:$0]  %s541, 128, %s538, %s527
        $region64: #{tpu_custom_call.1} parent=39 // pred_fallthru
          _
      $region40: #{tpu_custom_call.1} parent=5 // pred_fallthru
        _
      %p544 = scmp.le.s32.totalorder 2, %s21
      // Predicated region
      $region65: #{tpu_custom_call.1} parent=5 // pred_check
        %p545 = pneg %p544
      $region66: #{tpu_custom_call.1} parent=5 // pred_check_branch
        %547 = sbr.rel (%p545) target = $region68
      $region67: #{tpu_custom_call.1} parent=5 // pred_region
        %s548 = ssub.s32 %s21, 2
        // Predicated region
        $region69: #{tpu_custom_call.1} parent=67 // pred_check
          %p549 = pneg %p181
        $region70: #{tpu_custom_call.1} parent=67 // pred_check_branch
          %551 = sbr.rel (%p549) target = $region72
        $region71: #{tpu_custom_call.1} parent=67 // pred_region
          %s552 = sand.u32 %s166, 1
          %s553 = scalar_lea.sflag [#allocation4], %s552
          %s554 = sand.u32 %s166, 1
          %s555 = smul.addr %s554, 8
          %s556 = scalar_lea.vmem [#allocation10], %s555
          %557 = dma.done %s553, 128
        $region72: #{tpu_custom_call.1} parent=67 // pred_fallthru
          _
      $region68: #{tpu_custom_call.1} parent=5 // pred_fallthru
        _
    $region6: #{tpu_custom_call.1} parent=1 // loop_footer
      %s25 = sadd.s32 1, %s21
    $region7: #{tpu_custom_call.1} parent=1 // loop_footer_branch
      %20 = sbr.rel target = $region3
    $region8: #{tpu_custom_call.1} parent=1 // loop_exit
      _
    %558 = vsyncpa [#allocation3], 1
    %s559 = scalar_lea.sflag [#allocation3], 1
    %560 = vsyncpa %s559, 1
    %561 = vsyncpa [#allocation8], 1
    %s562 = scalar_lea.sflag [#allocation8], 1
    %563 = vsyncpa %s562, 1
    %564 = vsyncpa [#allocation4], 1
    %s565 = scalar_lea.sflag [#allocation4], 1
    %566 = vsyncpa %s565, 1
    %567 = vsyncpa [#allocation5], 1
    %s568 = scalar_lea.sflag [#allocation5], 1
    %569 = vsyncpa %s568, 1

</llo_original>
